<compile_context>
chip_gen: v7x
topology: tpu7x:2x2x1
jax: 0.10.0
libtpu: 0.0.40
codegen_flags: <defaults>
</compile_context>

<pallas_src>
import functools

import jax
import jax.numpy as jnp
from jax.experimental import pallas as pl
from jax.experimental.pallas import tpu as pltpu

_LANE = 128


def _round_up(n, m):
    return (n + m - 1) // m * m


def policy_kernel(x_ref, w1_ref, w2_ref, vec_ref, o_ref, *, hid_p, out_p):
    # vec_ref packs [b1; b2; constraints] as rows (static slices -> free).
    b1 = vec_ref[0:1, :hid_p]
    b2 = vec_ref[1:2, :out_p]
    c = vec_ref[2:3, :out_p]

    # Two MXU matmuls with f32 accumulation; bias/relu/tanh/scale in f32 on
    # VPU/EUP (non-saturating slots here).
    h = jnp.dot(x_ref[...], w1_ref[...], preferred_element_type=jnp.float32) + b1
    h = jnp.maximum(h, 0.0).astype(w2_ref.dtype)          # .clamp(min=0)
    out = jnp.dot(h, w2_ref[...], preferred_element_type=jnp.float32) + b2
    o_ref[...] = jnp.tanh(out) * c                          # rescale by constraints


@functools.partial(
    jax.jit, static_argnames=("out_size", "block_rows", "compute_dtype")
)
def policy_forward(x, w1p, w2p, vecs, *, out_size, block_rows=256,
                   compute_dtype=jnp.float32):
    """x: (B, input_size) f32. w1p/w2p/vecs: lane-padded params from init."""
    B, in_size = x.shape
    in_p, hid_p = w1p.shape
    hid_p2, out_p = w2p.shape
    assert hid_p2 == hid_p
    vec_w = vecs.shape[1]
    assert vec_w >= hid_p and vec_w >= out_p

    # Pad rows to a multiple of block_rows and lanes to in_p (zeros are inert:
    # padded W1 rows are zero, so padded x lanes contribute nothing).
    n_blocks = pl.cdiv(B, block_rows)
    b_pad = n_blocks * block_rows
    x_p = jnp.pad(x, ((0, b_pad - B), (0, in_p - in_size)))

    # Optional bf16 operand path (f32 accumulation kept in the kernel).
    x_p = x_p.astype(compute_dtype)
    w1c = w1p.astype(compute_dtype)
    w2c = w2p.astype(compute_dtype)

    kernel = functools.partial(policy_kernel, hid_p=hid_p, out_p=out_p)

    y_p = pl.pallas_call(
        kernel,
        out_shape=jax.ShapeDtypeStruct((b_pad, out_p), jnp.float32),
        grid_spec=pltpu.PrefetchScalarGridSpec(
            num_scalar_prefetch=0,
            grid=(n_blocks,),
            in_specs=[
                # x tile marches with the grid step.
                pl.BlockSpec((block_rows, in_p), lambda i: (i, 0)),
                # Weights / packed vectors: constant block index -> resident
                # in VMEM across all grid steps (DMA'd once).
                pl.BlockSpec((in_p, hid_p), lambda i: (0, 0)),
                pl.BlockSpec((hid_p, out_p), lambda i: (0, 0)),
                pl.BlockSpec((3, vec_w), lambda i: (0, 0)),
            ],
            # Lane-dense (out_p is a multiple of 128) unmasked output stores.
            out_specs=pl.BlockSpec((block_rows, out_p), lambda i: (i, 0)),
        ),
        compiler_params=pltpu.CompilerParams(
            dimension_semantics=("parallel",),
        ),
    )(x_p, w1c, w2c, vecs)

    return y_p[:B, :out_size]


def init_policy_params(key, input_size, hidden_size, out_size, constraints):
    """torch.nn.Linear-style uniform init, returned both padded (for the
    kernel) and unpadded (for the pure-JAX reference)."""
    k1, k2, k3, k4 = jax.random.split(key, 4)
    bound1 = 1.0 / jnp.sqrt(jnp.float32(input_size))
    bound2 = 1.0 / jnp.sqrt(jnp.float32(hidden_size))
    w1 = jax.random.uniform(k1, (input_size, hidden_size), jnp.float32,
                            minval=-bound1, maxval=bound1)
    b1 = jax.random.uniform(k2, (hidden_size,), jnp.float32,
                            minval=-bound1, maxval=bound1)
    w2 = jax.random.uniform(k3, (hidden_size, out_size), jnp.float32,
                            minval=-bound2, maxval=bound2)
    b2 = jax.random.uniform(k4, (out_size,), jnp.float32,
                            minval=-bound2, maxval=bound2)
    c = jnp.asarray(constraints, dtype=jnp.float32)

    # Zero-pad feature dims to 128 lanes: zeros contribute 0 to dot products,
    # relu(0)=0, tanh(0)*0=0 -> numerically identical after slicing.
    in_p = _round_up(input_size, _LANE)
    hid_p = _round_up(hidden_size, _LANE)
    out_p = _round_up(out_size, _LANE)
    vec_w = max(hid_p, out_p)

    w1p = jnp.zeros((in_p, hid_p), jnp.float32).at[:input_size, :hidden_size].set(w1)
    w2p = jnp.zeros((hid_p, out_p), jnp.float32).at[:hidden_size, :out_size].set(w2)
    vecs = jnp.zeros((3, vec_w), jnp.float32)
    vecs = vecs.at[0, :hidden_size].set(b1)
    vecs = vecs.at[1, :out_size].set(b2)
    vecs = vecs.at[2, :out_size].set(c)

    padded = (w1p, w2p, vecs)
    unpadded = (w1, b1, w2, b2, c)
    return padded, unpadded


def policy_reference(x, w1, b1, w2, b2, c):
    relu1 = jnp.maximum(x @ w1 + b1, 0.0)
    model_out = relu1 @ w2 + b2
    return jnp.tanh(model_out) * c


if __name__ == "__main__":
    input_size, hidden_size, out_size = 32, 32, 8
    batch = 512                      # amortizes launch/DMA overhead; grid=(2,)
    constraints = [0.5, 1.0, 1.5, 2.0, 2.5, 3.0, 3.5, 4.0]  # len == out_size

    key = jax.random.PRNGKey(0)
    kx, kp = jax.random.split(key)
    x = jax.random.normal(kx, (batch, input_size), dtype=jnp.float32)
    (w1p, w2p, vecs), (w1, b1, w2, b2, c) = init_policy_params(
        kp, input_size, hidden_size, out_size, constraints)

    # f32 path (exact vs reference).
    y = policy_forward(x, w1p, w2p, vecs, out_size=out_size, block_rows=256)
    y = jax.block_until_ready(y)

    y_ref = policy_reference(x, w1, b1, w2, b2, c)
    assert y.shape == (batch, out_size)
    assert jnp.allclose(y, y_ref, atol=1e-5, rtol=1e-5)

    # bf16-operand path (v6e/v7x MXU fast path), f32 accumulation in-kernel.
    y_bf16 = policy_forward(x, w1p, w2p, vecs, out_size=out_size,
                            block_rows=256, compute_dtype=jnp.bfloat16)
    y_bf16 = jax.block_until_ready(y_bf16)
    assert jnp.allclose(y_bf16, y_ref, atol=5e-2, rtol=5e-2)

    print("KERNEL_OK")
</pallas_src>

<mosaic_0001>
module attributes {stable_mosaic.version = 11 : i64} {
  func.func @policy_kernel(%arg0: i32, %arg1: memref<256x128xf32, #tpu.memory_space<vmem>>, %arg2: memref<128x128xf32, #tpu.memory_space<vmem>>, %arg3: memref<128x128xf32, #tpu.memory_space<vmem>>, %arg4: memref<3x128xf32, #tpu.memory_space<vmem>>, %arg5: memref<256x128xf32, #tpu.memory_space<vmem>>) attributes {dimension_semantics = [#tpu.dimension_semantics<parallel>], iteration_bounds = array<i64: 2>, scalar_prefetch = 0 : i64, scratch_operands = 0 : i64, tpu.core_type = #tpu.core_type<tc>, window_params = [{transform_indices = @transform_0, window_bounds = array<i64: 256, 128>}, {pipeline_mode = #tpu.pipeline_mode<synchronous>, transform_indices = @transform_1, window_bounds = array<i64: 128, 128>}, {pipeline_mode = #tpu.pipeline_mode<synchronous>, transform_indices = @transform_2, window_bounds = array<i64: 128, 128>}, {pipeline_mode = #tpu.pipeline_mode<synchronous>, transform_indices = @transform_3, window_bounds = array<i64: 3, 128>}, {transform_indices = @transform_4, window_bounds = array<i64: 256, 128>}]} {
    %c0 = arith.constant 0 : index
    %c0_0 = arith.constant 0 : index
    %0 = vector.load %arg4[%c0, %c0_0] : memref<3x128xf32, #tpu.memory_space<vmem>>, vector<1x128xf32>
    %c1 = arith.constant 1 : index
    %c0_1 = arith.constant 0 : index
    %1 = vector.load %arg4[%c1, %c0_1] : memref<3x128xf32, #tpu.memory_space<vmem>>, vector<1x128xf32>
    %c2 = arith.constant 2 : index
    %c0_2 = arith.constant 0 : index
    %2 = vector.load %arg4[%c2, %c0_2] : memref<3x128xf32, #tpu.memory_space<vmem>>, vector<1x128xf32>
    %c0_3 = arith.constant 0 : index
    %c0_4 = arith.constant 0 : index
    %3 = vector.load %arg1[%c0_3, %c0_4] : memref<256x128xf32, #tpu.memory_space<vmem>>, vector<256x128xf32>
    %c0_5 = arith.constant 0 : index
    %c0_6 = arith.constant 0 : index
    %4 = vector.load %arg2[%c0_5, %c0_6] : memref<128x128xf32, #tpu.memory_space<vmem>>, vector<128x128xf32>
    %cst = arith.constant dense<0.000000e+00> : vector<256x128xf32>
    %5 = tpu.matmul %3, %4, %cst {dimension_numbers = #tpu.dot_dimension_numbers<[1], [0], [0], [1], [0, 0, 1, 1], [], []>} : vector<256x128xf32>, vector<128x128xf32>, vector<256x128xf32> -> vector<256x128xf32>
    %6 = vector.broadcast %0 : vector<1x128xf32> to vector<256x128xf32>
    %7 = arith.addf %5, %6 : vector<256x128xf32>
    %cst_7 = arith.constant 0.000000e+00 : f32
    %8 = vector.broadcast %cst_7 : f32 to vector<256x128xf32>
    %9 = arith.maximumf %7, %8 : vector<256x128xf32>
    %c0_8 = arith.constant 0 : index
    %c0_9 = arith.constant 0 : index
    %10 = vector.load %arg3[%c0_8, %c0_9] : memref<128x128xf32, #tpu.memory_space<vmem>>, vector<128x128xf32>
    %cst_10 = arith.constant dense<0.000000e+00> : vector<256x128xf32>
    %11 = tpu.matmul %9, %10, %cst_10 {dimension_numbers = #tpu.dot_dimension_numbers<[1], [0], [0], [1], [0, 0, 1, 1], [], []>} : vector<256x128xf32>, vector<128x128xf32>, vector<256x128xf32> -> vector<256x128xf32>
    %12 = vector.broadcast %1 : vector<1x128xf32> to vector<256x128xf32>
    %13 = arith.addf %11, %12 : vector<256x128xf32>
    %14 = math.tanh %13 : vector<256x128xf32>
    %15 = vector.broadcast %2 : vector<1x128xf32> to vector<256x128xf32>
    %16 = arith.mulf %14, %15 : vector<256x128xf32>
    %c0_11 = arith.constant 0 : index
    %c0_12 = arith.constant 0 : index
    %17 = vector.load %arg5[%c0_11, %c0_12] : memref<256x128xf32, #tpu.memory_space<vmem>>, vector<256x128xf32>
    tpu.vector_store %arg5[%c0_11, %c0_12], %16 {strides = array<i32>} : memref<256x128xf32, #tpu.memory_space<vmem>>, vector<256x128xf32>,
    return
  }
  func.func @transform_0(%arg0: i32) -> (i32, i32) {
    %c0_i32 = arith.constant 0 : i32
    %c0_i32_0 = arith.constant 0 : i32
    return %arg0, %c0_i32 : i32, i32
  }
  func.func @transform_1(%arg0: i32) -> (i32, i32) {
    %c0_i32 = arith.constant 0 : i32
    %c0_i32_0 = arith.constant 0 : i32
    %c0_i32_1 = arith.constant 0 : i32
    return %c0_i32, %c0_i32_0 : i32, i32
  }
  func.func @transform_2(%arg0: i32) -> (i32, i32) {
    %c0_i32 = arith.constant 0 : i32
    %c0_i32_0 = arith.constant 0 : i32
    %c0_i32_1 = arith.constant 0 : i32
    return %c0_i32, %c0_i32_0 : i32, i32
  }
  func.func @transform_3(%arg0: i32) -> (i32, i32) {
    %c0_i32 = arith.constant 0 : i32
    %c0_i32_0 = arith.constant 0 : i32
    %c0_i32_1 = arith.constant 0 : i32
    return %c0_i32, %c0_i32_0 : i32, i32
  }
  func.func @transform_4(%arg0: i32) -> (i32, i32) {
    %c0_i32 = arith.constant 0 : i32
    %c0_i32_0 = arith.constant 0 : i32
    return %arg0, %c0_i32 : i32, i32
  }
}

</mosaic_0001>

<llo_original>
// kernel: policy_forward.1
$region0: #{policy_forward.1}
  #allocation0 [shape = 'u32[]', space=smem, size = 0x4, offset = 0x4, fixed_abs, tag = 'smem constant byte address 0x4 - core index']
  #allocation1 [shape = 'u32[144,128]{1,0:T(1,128)}', space=vmem, size = 0x12000, scoped, tag = 'internal scratch']
  %s0 = inlined_call_operand.vmem [shape: f32[512,128], index: 0, kind: input, shape index: {}]
  %s1 = inlined_call_operand.vmem [shape: f32[128,128], index: 1, kind: input, shape index: {}]
  %s2 = inlined_call_operand.vmem [shape: f32[128,128], index: 2, kind: input, shape index: {}]
  %s3 = inlined_call_operand.vmem [shape: f32[3,128], index: 3, kind: input, shape index: {}]
  %s4 = inlined_call_operand.vmem [shape: f32[512,128], index: 4, kind: output, shape index: {}]
  %s5 = sld [smem:[#allocation0]]
  $region49: #{policy_forward.1} parent=0
    _
  %s7 = ssub.s32 1, %s5
  %s8 = scalar_select 0, %s7, %s5
  loop: start=0, step=1, limit=4
  $region2: #{policy_forward.1} parent=0 // loop_pre_header
    _
  $region3: #{policy_forward.1} parent=0 // loop_header
    %s10 = sphi 0, %s14
    %p11 = scmp.ge.s32.totalorder %s10, 4
    %s20 = sphi 0, %s22
    %s23 = sphi 0, %s20
    %s24 = sphi 0, %s23
    %s40 = sphi 0, %s24
    %s44 = sphi 0, %s44
    %s46 = sphi 0, %s44
    %s47 = sphi 0, %s46
    %s61 = sphi 0, %s47
    %s65 = sphi 0, %s65
    %s67 = sphi 0, %s65
    %s68 = sphi 0, %s67
    %s82 = sphi 0, %s68
    %s86 = sphi 0, %s86
    %s88 = sphi 0, %s86
    %s89 = sphi 0, %s88
    %s103 = sphi 0, %s89
    %s109 = sphi 0, %s111
    %s112 = sphi 0, %s109
    %s113 = sphi 0, %s112
    %s129 = sphi 0, %s113
  $region4: #{policy_forward.1} parent=0 // loop_header_branch
    %13 = sbr.rel (%p11) target = $region8
  $region5: #{policy_forward.1} parent=0 // loop_body
    %s15 = ssub.s32 %s10, 1
    %s16 = ssub.s32 %s10, 2
    %s17 = sadd.s32 %s10, 1
    %s18 = ssub.s32 %s10, %s17
    %p19 = scmp.eq.s32.totalorder %s18, 0
    %s21 = sadd.s32 %s20, 1
    %s22 = scalar_select %p19, %s20, %s21
    %p25 = pneg %p19
    %p26 = scmp.eq.s32.totalorder %s10, 1
    %p27 = por %p25, %p26
    %p28 = scmp.ne.s32.totalorder %s20, %s23
    %p29 = scmp.eq.s32.totalorder %s10, 0
    %p30 = por %p28, %p29
    %p31 = scmp.ne.s32.totalorder %s20, %s23
    %p32 = scmp.eq.s32.totalorder %s15, 1
    %p33 = por %p31, %p32
    %p34 = scmp.ne.s32.totalorder %s23, %s24
    %p35 = scmp.eq.s32.totalorder %s15, 0
    %p36 = por %p34, %p35
    %p37 = scmp.ne.s32.totalorder %s23, %s24
    %p38 = scmp.eq.s32.totalorder %s16, 1
    %p39 = por %p37, %p38
    %p41 = scmp.ne.s32.totalorder %s24, %s40
    %p42 = scmp.eq.s32.totalorder %s16, 0
    %p43 = por %p41, %p42
    %s45 = sadd.s32 %s44, 1
    %p48 = scmp.eq.s32.totalorder %s10, 1
    %p49 = scmp.ne.s32.totalorder %s44, %s46
    %p50 = scmp.eq.s32.totalorder %s10, 0
    %p51 = por %p49, %p50
    %p52 = scmp.ne.s32.totalorder %s44, %s46
    %p53 = scmp.eq.s32.totalorder %s15, 1
    %p54 = por %p52, %p53
    %p55 = scmp.ne.s32.totalorder %s46, %s47
    %p56 = scmp.eq.s32.totalorder %s15, 0
    %p57 = por %p55, %p56
    %p58 = scmp.ne.s32.totalorder %s46, %s47
    %p59 = scmp.eq.s32.totalorder %s16, 1
    %p60 = por %p58, %p59
    %p62 = scmp.ne.s32.totalorder %s47, %s61
    %p63 = scmp.eq.s32.totalorder %s16, 0
    %p64 = por %p62, %p63
    %s66 = sadd.s32 %s65, 1
    %p69 = scmp.eq.s32.totalorder %s10, 1
    %p70 = scmp.ne.s32.totalorder %s65, %s67
    %p71 = scmp.eq.s32.totalorder %s10, 0
    %p72 = por %p70, %p71
    %p73 = scmp.ne.s32.totalorder %s65, %s67
    %p74 = scmp.eq.s32.totalorder %s15, 1
    %p75 = por %p73, %p74
    %p76 = scmp.ne.s32.totalorder %s67, %s68
    %p77 = scmp.eq.s32.totalorder %s15, 0
    %p78 = por %p76, %p77
    %p79 = scmp.ne.s32.totalorder %s67, %s68
    %p80 = scmp.eq.s32.totalorder %s16, 1
    %p81 = por %p79, %p80
    %p83 = scmp.ne.s32.totalorder %s68, %s82
    %p84 = scmp.eq.s32.totalorder %s16, 0
    %p85 = por %p83, %p84
    %s87 = sadd.s32 %s86, 1
    %p90 = scmp.eq.s32.totalorder %s10, 1
    %p91 = scmp.ne.s32.totalorder %s86, %s88
    %p92 = scmp.eq.s32.totalorder %s10, 0
    %p93 = por %p91, %p92
    %p94 = scmp.ne.s32.totalorder %s86, %s88
    %p95 = scmp.eq.s32.totalorder %s15, 1
    %p96 = por %p94, %p95
    %p97 = scmp.ne.s32.totalorder %s88, %s89
    %p98 = scmp.eq.s32.totalorder %s15, 0
    %p99 = por %p97, %p98
    %p100 = scmp.ne.s32.totalorder %s88, %s89
    %p101 = scmp.eq.s32.totalorder %s16, 1
    %p102 = por %p100, %p101
    %p104 = scmp.ne.s32.totalorder %s89, %s103
    %p105 = scmp.eq.s32.totalorder %s16, 0
    %p106 = por %p104, %p105
    %s107 = ssub.s32 %s10, %s17
    %p108 = scmp.eq.s32.totalorder %s107, 0
    %s110 = sadd.s32 %s109, 1
    %s111 = scalar_select %p108, %s109, %s110
    %p114 = pneg %p108
    %p115 = scmp.eq.s32.totalorder %s10, 1
    %p116 = por %p114, %p115
    %p117 = scmp.ne.s32.totalorder %s109, %s112
    %p118 = scmp.eq.s32.totalorder %s10, 0
    %p119 = por %p117, %p118
    %p120 = scmp.ne.s32.totalorder %s109, %s112
    %p121 = scmp.eq.s32.totalorder %s15, 1
    %p122 = por %p120, %p121
    %p123 = scmp.ne.s32.totalorder %s112, %s113
    %p124 = scmp.eq.s32.totalorder %s15, 0
    %p125 = por %p123, %p124
    %p126 = scmp.ne.s32.totalorder %s112, %s113
    %p127 = scmp.eq.s32.totalorder %s16, 1
    %p128 = por %p126, %p127
    %p130 = scmp.ne.s32.totalorder %s113, %s129
    %p131 = scmp.eq.s32.totalorder %s16, 0
    %p132 = por %p130, %p131
    %p133 = scmp.le.s32.totalorder 1, %s10
    %p134 = scmp.lt.s32.totalorder %s10, 3
    %p135 = pnand %p133, %p134
    %p136 = pneg %p135
    // Predicated region
    $region9: #{policy_forward.1} parent=5 // pred_check
      _
    $region10: #{policy_forward.1} parent=5 // pred_check_branch
      %138 = sbr.rel (%p135) target = $region12
    $region11: #{policy_forward.1} parent=5 // pred_region
      %s139 = ssub.s32 %s10, 1
      // Predicated region
      $region13: #{policy_forward.1} parent=11 // pred_check
        %p140 = pneg %p57
      $region14: #{policy_forward.1} parent=11 // pred_check_branch
        %142 = sbr.rel (%p140) target = $region16
      $region15: #{policy_forward.1} parent=11 // pred_region
        _
      $region16: #{policy_forward.1} parent=11 // pred_fallthru
        _
      // Predicated region
      $region17: #{policy_forward.1} parent=11 // pred_check
        %p143 = pneg %p78
      $region18: #{policy_forward.1} parent=11 // pred_check_branch
        %145 = sbr.rel (%p143) target = $region20
      $region19: #{policy_forward.1} parent=11 // pred_region
        _
      $region20: #{policy_forward.1} parent=11 // pred_fallthru
        _
      // Predicated region
      $region21: #{policy_forward.1} parent=11 // pred_check
        %p146 = pneg %p99
      $region22: #{policy_forward.1} parent=11 // pred_check_branch
        %148 = sbr.rel (%p146) target = $region24
      $region23: #{policy_forward.1} parent=11 // pred_region
        _
      $region24: #{policy_forward.1} parent=11 // pred_fallthru
        _
    $region12: #{policy_forward.1} parent=5 // pred_fallthru
      _
    %p149 = scmp.lt.s32.totalorder %s10, 2
    // Predicated region
    $region25: #{policy_forward.1} parent=5 // pred_check
      %p150 = pneg %p149
    $region26: #{policy_forward.1} parent=5 // pred_check_branch
      %152 = sbr.rel (%p150) target = $region28
    $region27: #{policy_forward.1} parent=5 // pred_region
      // Predicated region
      $region29: #{policy_forward.1} parent=27 // pred_check
        %p153 = pneg %p30
      $region30: #{policy_forward.1} parent=27 // pred_check_branch
        %155 = sbr.rel (%p153) target = $region32
      $region31: #{policy_forward.1} parent=27 // pred_region
        %s156 = smul.u32 32, %s10
        %p157 = scmp.lt.s32.totalorder %s156, 63
        %s158 = scalar_select %p157, %s156, 63
        %s159 = smul.addr %s158, 8
        %s160 = scalar_lea.vmem %s0, %s159
        %s161 = smul.u32 32, %s10
      $region32: #{policy_forward.1} parent=27 // pred_fallthru
        _
    $region28: #{policy_forward.1} parent=5 // pred_fallthru
      _
    %p162 = scmp.le.s32.totalorder 1, %s10
    %p163 = scmp.lt.s32.totalorder %s10, 3
    %p164 = pnand %p162, %p163
    %p165 = pneg %p164
    // Predicated region
    $region33: #{policy_forward.1} parent=5 // pred_check
      _
    $region34: #{policy_forward.1} parent=5 // pred_check_branch
      %167 = sbr.rel (%p164) target = $region36
    $region35: #{policy_forward.1} parent=5 // pred_region
      %s168 = ssub.s32 %s10, 1
      %s169 = smul.u32 32, %s15
      %p170 = scmp.lt.s32.totalorder %s169, 63
      %s171 = scalar_select %p170, %s169, 63
      %s172 = smul.addr %s171, 8
      %s173 = scalar_lea.vmem %s0, %s172
      %p174 = pneg %p36
      %p175 = pneg %p33
      %p176 = pneg %p57
      %p177 = pneg %p54
      %p178 = pneg %p78
      %p179 = pneg %p75
      %p180 = pneg %p99
      %p181 = pneg %p96
      %p182 = pneg %p125
      %p183 = pneg %p122
      %s184 = smul.u32 32, %s15
      %p185 = scmp.lt.s32.totalorder %s184, 63
      %s186 = scalar_select %p185, %s184, 63
      %s187 = smul.addr %s186, 8
      %s188 = scalar_lea.vmem %s4, %s187
      %s189 = smul.u32 32, %s15
      %p190 = scmp.lt.s32.totalorder %s189, 63
      %s191 = scalar_select %p190, %s189, 63
      %s192 = smul.addr %s191, 8
      %s193 = scalar_lea.vmem %s0, %s192
      %s194 = smul.u32 32, %s15
      %s195 = smul.u32 32, %s15
      %p196 = scmp.lt.s32.totalorder %s195, 63
      %s197 = scalar_select %p196, %s195, 63
      %s198 = smul.addr %s197, 8
      %s199 = scalar_lea.vmem %s4, %s198
      %s200 = smul.u32 32, %s15
      %v201 = vld [vmem:[%s3] sm:$0x1]
      %v202 = vld [vmem:[%s3 + $0x1] sm:$0x1]
      %v203 = vld [vmem:[%s3 + $0x2] sm:$0x1]
      %v204 = vld [vmem:[%s193] sm:$0xff]
      %v205 = vld [vmem:[%s193 + $0x8] sm:$0xff]
      %v206 = vld [vmem:[%s193 + $0x10] sm:$0xff]
      %v207 = vld [vmem:[%s193 + $0x18] sm:$0xff]
      %v208 = vld [vmem:[%s193 + $0x20] sm:$0xff]
      %v209 = vld [vmem:[%s193 + $0x28] sm:$0xff]
      %v210 = vld [vmem:[%s193 + $0x30] sm:$0xff]
      %v211 = vld [vmem:[%s193 + $0x38] sm:$0xff]
      %v212 = vld [vmem:[%s193 + $0x40] sm:$0xff]
      %v213 = vld [vmem:[%s193 + $0x48] sm:$0xff]
      %v214 = vld [vmem:[%s193 + $0x50] sm:$0xff]
      %v215 = vld [vmem:[%s193 + $0x58] sm:$0xff]
      %v216 = vld [vmem:[%s193 + $0x60] sm:$0xff]
      %v217 = vld [vmem:[%s193 + $0x68] sm:$0xff]
      %v218 = vld [vmem:[%s193 + $0x70] sm:$0xff]
      %v219 = vld [vmem:[%s193 + $0x78] sm:$0xff]
      %v220 = vld [vmem:[%s193 + $0x80] sm:$0xff]
      %v221 = vld [vmem:[%s193 + $0x88] sm:$0xff]
      %v222 = vld [vmem:[%s193 + $0x90] sm:$0xff]
      %v223 = vld [vmem:[%s193 + $0x98] sm:$0xff]
      %v224 = vld [vmem:[%s193 + $0xa0] sm:$0xff]
      %v225 = vld [vmem:[%s193 + $0xa8] sm:$0xff]
      %v226 = vld [vmem:[%s193 + $0xb0] sm:$0xff]
      %v227 = vld [vmem:[%s193 + $0xb8] sm:$0xff]
      %v228 = vld [vmem:[%s193 + $0xc0] sm:$0xff]
      %v229 = vld [vmem:[%s193 + $0xc8] sm:$0xff]
      %v230 = vld [vmem:[%s193 + $0xd0] sm:$0xff]
      %v231 = vld [vmem:[%s193 + $0xd8] sm:$0xff]
      %v232 = vld [vmem:[%s193 + $0xe0] sm:$0xff]
      %v233 = vld [vmem:[%s193 + $0xe8] sm:$0xff]
      %v234 = vld [vmem:[%s193 + $0xf0] sm:$0xff]
      %v235 = vld [vmem:[%s193 + $0xf8] sm:$0xff]
      %v236 = vld [vmem:[%s1] sm:$0xff]
      %v237 = vld [vmem:[%s1 + $0x8] sm:$0xff]
      %v238 = vld [vmem:[%s1 + $0x10] sm:$0xff]
      %v239 = vld [vmem:[%s1 + $0x18] sm:$0xff]
      %v240 = vld [vmem:[%s1 + $0x20] sm:$0xff]
      %v241 = vld [vmem:[%s1 + $0x28] sm:$0xff]
      %v242 = vld [vmem:[%s1 + $0x30] sm:$0xff]
      %v243 = vld [vmem:[%s1 + $0x38] sm:$0xff]
      %v244 = vld [vmem:[%s1 + $0x40] sm:$0xff]
      %v245 = vld [vmem:[%s1 + $0x48] sm:$0xff]
      %v246 = vld [vmem:[%s1 + $0x50] sm:$0xff]
      %v247 = vld [vmem:[%s1 + $0x58] sm:$0xff]
      %v248 = vld [vmem:[%s1 + $0x60] sm:$0xff]
      %v249 = vld [vmem:[%s1 + $0x68] sm:$0xff]
      %v250 = vld [vmem:[%s1 + $0x70] sm:$0xff]
      %v251 = vld [vmem:[%s1 + $0x78] sm:$0xff]
      %v252 = vlaneseq
      %v253 = vshrl.u32 %v252, 7
      %v254 = vsub.s32 0, %v253
      %v255 = vrot.slane %v201, %v254
      %256 = vmatprep.subr.mxu0 0.0
      %257 = vmatpush1.msra.mxu0 %v236
      %258 = vmatprep.subr.mxu0 0.0
      %259 = vmatpush1.msra.mxu0 %v237
      %260 = vmatprep.subr.mxu0 0.0
      %261 = vmatpush1.msra.mxu0 %v238
      %262 = vmatprep.subr.mxu0 0.0
      %263 = vmatpush1.msra.mxu0 %v239
      %264 = vmatprep.subr.mxu0 0.0
      %265 = vmatpush1.msra.mxu0 %v240
      %266 = vmatprep.subr.mxu0 0.0
      %267 = vmatpush1.msra.mxu0 %v241
      %268 = vmatprep.subr.mxu0 0.0
      %269 = vmatpush1.msra.mxu0 %v242
      %270 = vmatprep.subr.mxu0 0.0
      %271 = vmatpush1.msra.mxu0 %v243
      %272 = vmatprep.subr.mxu0 0.0
      %273 = vmatpush1.msra.mxu0 %v244
      %274 = vmatprep.subr.mxu0 0.0
      %275 = vmatpush1.msra.mxu0 %v245
      %276 = vmatprep.subr.mxu0 0.0
      %277 = vmatpush1.msra.mxu0 %v246
      %278 = vmatprep.subr.mxu0 0.0
      %279 = vmatpush1.msra.mxu0 %v247
      %280 = vmatprep.subr.mxu0 0.0
      %281 = vmatpush1.msra.mxu0 %v248
      %282 = vmatprep.subr.mxu0 0.0
      %283 = vmatpush1.msra.mxu0 %v249
      %284 = vmatprep.subr.mxu0 0.0
      %285 = vmatpush1.msra.mxu0 %v250
      %286 = vmatprep.subr.mxu0 0.0
      %287 = vmatpush1.msra.mxu0 %v251
      %288 = vmatprep.subr.mxu0 0.0
      %289 = vmatpush1.msra.mxu0 0.0
      %290 = vmatprep.subr.mxu0 0.0
      %291 = vmatpush1.msra.mxu0 0.0
      %292 = vmatprep.subr.mxu0 0.0
      %293 = vmatpush1.msra.mxu0 0.0
      %294 = vmatprep.subr.mxu0 0.0
      %295 = vmatpush1.msra.mxu0 0.0
      %296 = vmatprep.subr.mxu0 0.0
      %297 = vmatpush1.msra.mxu0 0.0
      %298 = vmatprep.subr.mxu0 0.0
      %299 = vmatpush1.msra.mxu0 0.0
      %300 = vmatprep.subr.mxu0 0.0
      %301 = vmatpush1.msra.mxu0 0.0
      %302 = vmatprep.subr.mxu0 0.0
      %303 = vmatpush1.msra.mxu0 0.0
      %304 = vmatprep.subr.mxu0 0.0
      %305 = vmatpush1.msra.mxu0 0.0
      %306 = vmatprep.subr.mxu0 0.0
      %307 = vmatpush1.msra.mxu0 0.0
      %308 = vmatprep.subr.mxu0 0.0
      %309 = vmatpush1.msra.mxu0 0.0
      %310 = vmatprep.subr.mxu0 0.0
      %311 = vmatpush1.msra.mxu0 0.0
      %312 = vmatprep.subr.mxu0 0.0
      %313 = vmatpush1.msra.mxu0 0.0
      %314 = vmatprep.subr.mxu0 0.0
      %315 = vmatpush1.msra.mxu0 0.0
      %316 = vmatprep.subr.mxu0 0.0
      %317 = vmatpush1.msra.mxu0 0.0
      %318 = vmatprep.subr.mxu0 0.0
      %319 = vmatpush1.msra.mxu0 0.0
      %320 = vmatprep.mubr.f32.mxu0 0.0
      %321 = vmatmul.mubr.f32.gmra.mrb[0].mxu0 %v204
      %v322 = vpop.f32.mrb[0].mxu0
      %v323 = vadd.f32 %v255, %v322
      %v324 = vpop.f32.mrb[0].mxu0
      %325 = vmatprep.mubr.f32.mxu0 0.0
      %326 = vmatmul.mubr.f32.gmra.mrb[0].mxu0 %v205
      %v327 = vpop.f32.mrb[0].mxu0
      %v328 = vadd.f32 %v255, %v327
      %v329 = vpop.f32.mrb[0].mxu0
      %330 = vmatprep.mubr.f32.mxu0 0.0
      %331 = vmatmul.mubr.f32.gmra.mrb[0].mxu0 %v206
      %v332 = vpop.f32.mrb[0].mxu0
      %v333 = vadd.f32 %v255, %v332
      %v334 = vpop.f32.mrb[0].mxu0
      %335 = vmatprep.mubr.f32.mxu0 0.0
      %336 = vmatmul.mubr.f32.gmra.mrb[0].mxu0 %v207
      %v337 = vpop.f32.mrb[0].mxu0
      %v338 = vadd.f32 %v255, %v337
      %v339 = vpop.f32.mrb[0].mxu0
      %340 = vmatprep.mubr.f32.mxu0 0.0
      %341 = vmatmul.mubr.f32.gmra.mrb[0].mxu0 %v208
      %v342 = vpop.f32.mrb[0].mxu0
      %v343 = vadd.f32 %v255, %v342
      %v344 = vpop.f32.mrb[0].mxu0
      %345 = vmatprep.mubr.f32.mxu0 0.0
      %346 = vmatmul.mubr.f32.gmra.mrb[0].mxu0 %v209
      %v347 = vpop.f32.mrb[0].mxu0
      %v348 = vadd.f32 %v255, %v347
      %v349 = vpop.f32.mrb[0].mxu0
      %350 = vmatprep.mubr.f32.mxu0 0.0
      %351 = vmatmul.mubr.f32.gmra.mrb[0].mxu0 %v210
      %v352 = vpop.f32.mrb[0].mxu0
      %v353 = vadd.f32 %v255, %v352
      %v354 = vpop.f32.mrb[0].mxu0
      %355 = vmatprep.mubr.f32.mxu0 0.0
      %356 = vmatmul.mubr.f32.gmra.mrb[0].mxu0 %v211
      %v357 = vpop.f32.mrb[0].mxu0
      %v358 = vadd.f32 %v255, %v357
      %v359 = vpop.f32.mrb[0].mxu0
      %360 = vmatprep.mubr.f32.mxu0 0.0
      %361 = vmatmul.mubr.f32.gmra.mrb[0].mxu0 %v212
      %v362 = vpop.f32.mrb[0].mxu0
      %v363 = vadd.f32 %v255, %v362
      %v364 = vpop.f32.mrb[0].mxu0
      %365 = vmatprep.mubr.f32.mxu0 0.0
      %366 = vmatmul.mubr.f32.gmra.mrb[0].mxu0 %v213
      %v367 = vpop.f32.mrb[0].mxu0
      %v368 = vadd.f32 %v255, %v367
      %v369 = vpop.f32.mrb[0].mxu0
      %370 = vmatprep.mubr.f32.mxu0 0.0
      %371 = vmatmul.mubr.f32.gmra.mrb[0].mxu0 %v214
      %v372 = vpop.f32.mrb[0].mxu0
      %v373 = vadd.f32 %v255, %v372
      %v374 = vpop.f32.mrb[0].mxu0
      %375 = vmatprep.mubr.f32.mxu0 0.0
      %376 = vmatmul.mubr.f32.gmra.mrb[0].mxu0 %v215
      %v377 = vpop.f32.mrb[0].mxu0
      %v378 = vadd.f32 %v255, %v377
      %v379 = vpop.f32.mrb[0].mxu0
      %380 = vmatprep.mubr.f32.mxu0 0.0
      %381 = vmatmul.mubr.f32.gmra.mrb[0].mxu0 %v216
      %v382 = vpop.f32.mrb[0].mxu0
      %v383 = vadd.f32 %v255, %v382
      %v384 = vpop.f32.mrb[0].mxu0
      %385 = vmatprep.mubr.f32.mxu0 0.0
      %386 = vmatmul.mubr.f32.gmra.mrb[0].mxu0 %v217
      %v387 = vpop.f32.mrb[0].mxu0
      %v388 = vadd.f32 %v255, %v387
      %v389 = vpop.f32.mrb[0].mxu0
      %390 = vmatprep.mubr.f32.mxu0 0.0
      %391 = vmatmul.mubr.f32.gmra.mrb[0].mxu0 %v218
      %v392 = vpop.f32.mrb[0].mxu0
      %v393 = vadd.f32 %v255, %v392
      %v394 = vpop.f32.mrb[0].mxu0
      %395 = vmatprep.mubr.f32.mxu0 0.0
      %396 = vmatmul.mubr.f32.gmra.mrb[0].mxu0 %v219
      %v397 = vpop.f32.mrb[0].mxu0
      %v398 = vadd.f32 %v255, %v397
      %v399 = vpop.f32.mrb[0].mxu0
      %400 = vmatprep.mubr.f32.mxu0 0.0
      %401 = vmatmul.mubr.f32.gmra.mrb[0].mxu0 %v220
      %v402 = vpop.f32.mrb[0].mxu0
      %v403 = vadd.f32 %v255, %v402
      %v404 = vpop.f32.mrb[0].mxu0
      %405 = vmatprep.mubr.f32.mxu0 0.0
      %406 = vmatmul.mubr.f32.gmra.mrb[0].mxu0 %v221
      %v407 = vpop.f32.mrb[0].mxu0
      %v408 = vadd.f32 %v255, %v407
      %v409 = vpop.f32.mrb[0].mxu0
      %410 = vmatprep.mubr.f32.mxu0 0.0
      %411 = vmatmul.mubr.f32.gmra.mrb[0].mxu0 %v222
      %v412 = vpop.f32.mrb[0].mxu0
      %v413 = vadd.f32 %v255, %v412
      %v414 = vpop.f32.mrb[0].mxu0
      %415 = vmatprep.mubr.f32.mxu0 0.0
      %416 = vmatmul.mubr.f32.gmra.mrb[0].mxu0 %v223
      %v417 = vpop.f32.mrb[0].mxu0
      %v418 = vadd.f32 %v255, %v417
      %v419 = vpop.f32.mrb[0].mxu0
      %420 = vmatprep.mubr.f32.mxu0 0.0
      %421 = vmatmul.mubr.f32.gmra.mrb[0].mxu0 %v224
      %v422 = vpop.f32.mrb[0].mxu0
      %v423 = vadd.f32 %v255, %v422
      %v424 = vpop.f32.mrb[0].mxu0
      %425 = vmatprep.mubr.f32.mxu0 0.0
      %426 = vmatmul.mubr.f32.gmra.mrb[0].mxu0 %v225
      %v427 = vpop.f32.mrb[0].mxu0
      %v428 = vadd.f32 %v255, %v427
      %v429 = vpop.f32.mrb[0].mxu0
      %430 = vmatprep.mubr.f32.mxu0 0.0
      %431 = vmatmul.mubr.f32.gmra.mrb[0].mxu0 %v226
      %v432 = vpop.f32.mrb[0].mxu0
      %v433 = vadd.f32 %v255, %v432
      %v434 = vpop.f32.mrb[0].mxu0
      %435 = vmatprep.mubr.f32.mxu0 0.0
      %436 = vmatmul.mubr.f32.gmra.mrb[0].mxu0 %v227
      %v437 = vpop.f32.mrb[0].mxu0
      %v438 = vadd.f32 %v255, %v437
      %v439 = vpop.f32.mrb[0].mxu0
      %440 = vmatprep.mubr.f32.mxu0 0.0
      %441 = vmatmul.mubr.f32.gmra.mrb[0].mxu0 %v228
      %v442 = vpop.f32.mrb[0].mxu0
      %v443 = vadd.f32 %v255, %v442
      %v444 = vpop.f32.mrb[0].mxu0
      %445 = vmatprep.mubr.f32.mxu0 0.0
      %446 = vmatmul.mubr.f32.gmra.mrb[0].mxu0 %v229
      %v447 = vpop.f32.mrb[0].mxu0
      %v448 = vadd.f32 %v255, %v447
      %v449 = vpop.f32.mrb[0].mxu0
      %450 = vmatprep.mubr.f32.mxu0 0.0
      %451 = vmatmul.mubr.f32.gmra.mrb[0].mxu0 %v230
      %v452 = vpop.f32.mrb[0].mxu0
      %v453 = vadd.f32 %v255, %v452
      %v454 = vpop.f32.mrb[0].mxu0
      %455 = vmatprep.mubr.f32.mxu0 0.0
      %456 = vmatmul.mubr.f32.gmra.mrb[0].mxu0 %v231
      %v457 = vpop.f32.mrb[0].mxu0
      %v458 = vadd.f32 %v255, %v457
      %v459 = vpop.f32.mrb[0].mxu0
      %460 = vmatprep.mubr.f32.mxu0 0.0
      %461 = vmatmul.mubr.f32.gmra.mrb[0].mxu0 %v232
      %v462 = vpop.f32.mrb[0].mxu0
      %v463 = vadd.f32 %v255, %v462
      %v464 = vpop.f32.mrb[0].mxu0
      %465 = vmatprep.mubr.f32.mxu0 0.0
      %466 = vmatmul.mubr.f32.gmra.mrb[0].mxu0 %v233
      %v467 = vpop.f32.mrb[0].mxu0
      %v468 = vadd.f32 %v255, %v467
      %v469 = vpop.f32.mrb[0].mxu0
      %470 = vmatprep.mubr.f32.mxu0 0.0
      %471 = vmatmul.mubr.f32.gmra.mrb[0].mxu0 %v234
      %v472 = vpop.f32.mrb[0].mxu0
      %v473 = vadd.f32 %v255, %v472
      %v474 = vpop.f32.mrb[0].mxu0
      %475 = vmatprep.mubr.f32.mxu0 0.0
      %476 = vmatmul.mubr.f32.gmra.mrb[0].mxu0 %v235
      %v477 = vpop.f32.mrb[0].mxu0
      %v478 = vadd.f32 %v255, %v477
      %v479 = vpop.f32.mrb[0].mxu0
      %480 = vdwg.mxu0
      %v481 = vmax.f32 %v323, 0.0
      %v482 = vmax.f32 %v328, 0.0
      %v483 = vmax.f32 %v333, 0.0
      %v484 = vmax.f32 %v338, 0.0
      %v485 = vmax.f32 %v343, 0.0
      %v486 = vmax.f32 %v348, 0.0
      %v487 = vmax.f32 %v353, 0.0
      %v488 = vmax.f32 %v358, 0.0
      %v489 = vmax.f32 %v363, 0.0
      %v490 = vmax.f32 %v368, 0.0
      %v491 = vmax.f32 %v373, 0.0
      %v492 = vmax.f32 %v378, 0.0
      %v493 = vmax.f32 %v383, 0.0
      %v494 = vmax.f32 %v388, 0.0
      %v495 = vmax.f32 %v393, 0.0
      %v496 = vmax.f32 %v398, 0.0
      %v497 = vmax.f32 %v403, 0.0
      %v498 = vmax.f32 %v408, 0.0
      %v499 = vmax.f32 %v413, 0.0
      %v500 = vmax.f32 %v418, 0.0
      %v501 = vmax.f32 %v423, 0.0
      %v502 = vmax.f32 %v428, 0.0
      %v503 = vmax.f32 %v433, 0.0
      %v504 = vmax.f32 %v438, 0.0
      %v505 = vmax.f32 %v443, 0.0
      %v506 = vmax.f32 %v448, 0.0
      %v507 = vmax.f32 %v453, 0.0
      %v508 = vmax.f32 %v458, 0.0
      %v509 = vmax.f32 %v463, 0.0
      %v510 = vmax.f32 %v468, 0.0
      %v511 = vmax.f32 %v473, 0.0
      %v512 = vmax.f32 %v478, 0.0
      %v513 = vld [vmem:[%s2] sm:$0xff]
      %v514 = vld [vmem:[%s2 + $0x8] sm:$0xff]
      %v515 = vld [vmem:[%s2 + $0x10] sm:$0xff]
      %v516 = vld [vmem:[%s2 + $0x18] sm:$0xff]
      %v517 = vld [vmem:[%s2 + $0x20] sm:$0xff]
      %v518 = vld [vmem:[%s2 + $0x28] sm:$0xff]
      %v519 = vld [vmem:[%s2 + $0x30] sm:$0xff]
      %v520 = vld [vmem:[%s2 + $0x38] sm:$0xff]
      %v521 = vld [vmem:[%s2 + $0x40] sm:$0xff]
      %v522 = vld [vmem:[%s2 + $0x48] sm:$0xff]
      %v523 = vld [vmem:[%s2 + $0x50] sm:$0xff]
      %v524 = vld [vmem:[%s2 + $0x58] sm:$0xff]
      %v525 = vld [vmem:[%s2 + $0x60] sm:$0xff]
      %v526 = vld [vmem:[%s2 + $0x68] sm:$0xff]
      %v527 = vld [vmem:[%s2 + $0x70] sm:$0xff]
      %v528 = vld [vmem:[%s2 + $0x78] sm:$0xff]
      %v529 = vlaneseq
      %v530 = vshrl.u32 %v529, 7
      %v531 = vsub.s32 0, %v530
      %v532 = vrot.slane %v202, %v531
      %533 = vmatprep.subr.mxu0 0.0
      %534 = vmatpush1.msra.mxu0 %v513
      %535 = vmatprep.subr.mxu0 0.0
      %536 = vmatpush1.msra.mxu0 %v514
      %537 = vmatprep.subr.mxu0 0.0
      %538 = vmatpush1.msra.mxu0 %v515
      %539 = vmatprep.subr.mxu0 0.0
      %540 = vmatpush1.msra.mxu0 %v516
      %541 = vmatprep.subr.mxu0 0.0
      %542 = vmatpush1.msra.mxu0 %v517
      %543 = vmatprep.subr.mxu0 0.0
      %544 = vmatpush1.msra.mxu0 %v518
      %545 = vmatprep.subr.mxu0 0.0
      %546 = vmatpush1.msra.mxu0 %v519
      %547 = vmatprep.subr.mxu0 0.0
      %548 = vmatpush1.msra.mxu0 %v520
      %549 = vmatprep.subr.mxu0 0.0
      %550 = vmatpush1.msra.mxu0 %v521
      %551 = vmatprep.subr.mxu0 0.0
      %552 = vmatpush1.msra.mxu0 %v522
      %553 = vmatprep.subr.mxu0 0.0
      %554 = vmatpush1.msra.mxu0 %v523
      %555 = vmatprep.subr.mxu0 0.0
      %556 = vmatpush1.msra.mxu0 %v524
      %557 = vmatprep.subr.mxu0 0.0
      %558 = vmatpush1.msra.mxu0 %v525
      %559 = vmatprep.subr.mxu0 0.0
      %560 = vmatpush1.msra.mxu0 %v526
      %561 = vmatprep.subr.mxu0 0.0
      %562 = vmatpush1.msra.mxu0 %v527
      %563 = vmatprep.subr.mxu0 0.0
      %564 = vmatpush1.msra.mxu0 %v528
      %565 = vmatprep.subr.mxu0 0.0
      %566 = vmatpush1.msra.mxu0 0.0
      %567 = vmatprep.subr.mxu0 0.0
      %568 = vmatpush1.msra.mxu0 0.0
      %569 = vmatprep.subr.mxu0 0.0
      %570 = vmatpush1.msra.mxu0 0.0
      %571 = vmatprep.subr.mxu0 0.0
      %572 = vmatpush1.msra.mxu0 0.0
      %573 = vmatprep.subr.mxu0 0.0
      %574 = vmatpush1.msra.mxu0 0.0
      %575 = vmatprep.subr.mxu0 0.0
      %576 = vmatpush1.msra.mxu0 0.0
      %577 = vmatprep.subr.mxu0 0.0
      %578 = vmatpush1.msra.mxu0 0.0
      %579 = vmatprep.subr.mxu0 0.0
      %580 = vmatpush1.msra.mxu0 0.0
      %581 = vmatprep.subr.mxu0 0.0
      %582 = vmatpush1.msra.mxu0 0.0
      %583 = vmatprep.subr.mxu0 0.0
      %584 = vmatpush1.msra.mxu0 0.0
      %585 = vmatprep.subr.mxu0 0.0
      %586 = vmatpush1.msra.mxu0 0.0
      %587 = vmatprep.subr.mxu0 0.0
      %588 = vmatpush1.msra.mxu0 0.0
      %589 = vmatprep.subr.mxu0 0.0
      %590 = vmatpush1.msra.mxu0 0.0
      %591 = vmatprep.subr.mxu0 0.0
      %592 = vmatpush1.msra.mxu0 0.0
      %593 = vmatprep.subr.mxu0 0.0
      %594 = vmatpush1.msra.mxu0 0.0
      %595 = vmatprep.subr.mxu0 0.0
      %596 = vmatpush1.msra.mxu0 0.0
      %597 = vmatprep.mubr.f32.mxu0 0.0
      %598 = vmatmul.mubr.f32.gmra.mrb[0].mxu0 %v481
      %v599 = vpop.f32.mrb[0].mxu0
      %v600 = vadd.f32 %v532, %v599
      %v601 = vpop.f32.mrb[0].mxu0
      %602 = vmatprep.mubr.f32.mxu0 0.0
      %603 = vmatmul.mubr.f32.gmra.mrb[0].mxu0 %v482
      %v604 = vpop.f32.mrb[0].mxu0
      %v605 = vadd.f32 %v532, %v604
      %v606 = vpop.f32.mrb[0].mxu0
      %607 = vmatprep.mubr.f32.mxu0 0.0
      %608 = vmatmul.mubr.f32.gmra.mrb[0].mxu0 %v483
      %v609 = vpop.f32.mrb[0].mxu0
      %v610 = vadd.f32 %v532, %v609
      %v611 = vpop.f32.mrb[0].mxu0
      %612 = vmatprep.mubr.f32.mxu0 0.0
      %613 = vmatmul.mubr.f32.gmra.mrb[0].mxu0 %v484
      %v614 = vpop.f32.mrb[0].mxu0
      %v615 = vadd.f32 %v532, %v614
      %v616 = vpop.f32.mrb[0].mxu0
      %617 = vmatprep.mubr.f32.mxu0 0.0
      %618 = vmatmul.mubr.f32.gmra.mrb[0].mxu0 %v485
      %v619 = vpop.f32.mrb[0].mxu0
      %v620 = vadd.f32 %v532, %v619
      %v621 = vpop.f32.mrb[0].mxu0
      %622 = vmatprep.mubr.f32.mxu0 0.0
      %623 = vmatmul.mubr.f32.gmra.mrb[0].mxu0 %v486
      %v624 = vpop.f32.mrb[0].mxu0
      %v625 = vadd.f32 %v532, %v624
      %v626 = vpop.f32.mrb[0].mxu0
      %627 = vmatprep.mubr.f32.mxu0 0.0
      %628 = vmatmul.mubr.f32.gmra.mrb[0].mxu0 %v487
      %v629 = vpop.f32.mrb[0].mxu0
      %v630 = vadd.f32 %v532, %v629
      %v631 = vpop.f32.mrb[0].mxu0
      %632 = vmatprep.mubr.f32.mxu0 0.0
      %633 = vmatmul.mubr.f32.gmra.mrb[0].mxu0 %v488
      %v634 = vpop.f32.mrb[0].mxu0
      %v635 = vadd.f32 %v532, %v634
      %v636 = vpop.f32.mrb[0].mxu0
      %637 = vmatprep.mubr.f32.mxu0 0.0
      %638 = vmatmul.mubr.f32.gmra.mrb[0].mxu0 %v489
      %v639 = vpop.f32.mrb[0].mxu0
      %v640 = vadd.f32 %v532, %v639
      %v641 = vpop.f32.mrb[0].mxu0
      %642 = vmatprep.mubr.f32.mxu0 0.0
      %643 = vmatmul.mubr.f32.gmra.mrb[0].mxu0 %v490
      %v644 = vpop.f32.mrb[0].mxu0
      %v645 = vadd.f32 %v532, %v644
      %v646 = vpop.f32.mrb[0].mxu0
      %647 = vmatprep.mubr.f32.mxu0 0.0
      %648 = vmatmul.mubr.f32.gmra.mrb[0].mxu0 %v491
      %v649 = vpop.f32.mrb[0].mxu0
      %v650 = vadd.f32 %v532, %v649
      %v651 = vpop.f32.mrb[0].mxu0
      %652 = vmatprep.mubr.f32.mxu0 0.0
      %653 = vmatmul.mubr.f32.gmra.mrb[0].mxu0 %v492
      %v654 = vpop.f32.mrb[0].mxu0
      %v655 = vadd.f32 %v532, %v654
      %v656 = vpop.f32.mrb[0].mxu0
      %657 = vmatprep.mubr.f32.mxu0 0.0
      %658 = vmatmul.mubr.f32.gmra.mrb[0].mxu0 %v493
      %v659 = vpop.f32.mrb[0].mxu0
      %v660 = vadd.f32 %v532, %v659
      %v661 = vpop.f32.mrb[0].mxu0
      %662 = vmatprep.mubr.f32.mxu0 0.0
      %663 = vmatmul.mubr.f32.gmra.mrb[0].mxu0 %v494
      %v664 = vpop.f32.mrb[0].mxu0
      %v665 = vadd.f32 %v532, %v664
      %v666 = vpop.f32.mrb[0].mxu0
      %667 = vmatprep.mubr.f32.mxu0 0.0
      %668 = vmatmul.mubr.f32.gmra.mrb[0].mxu0 %v495
      %v669 = vpop.f32.mrb[0].mxu0
      %v670 = vadd.f32 %v532, %v669
      %v671 = vpop.f32.mrb[0].mxu0
      %672 = vmatprep.mubr.f32.mxu0 0.0
      %673 = vmatmul.mubr.f32.gmra.mrb[0].mxu0 %v496
      %v674 = vpop.f32.mrb[0].mxu0
      %v675 = vadd.f32 %v532, %v674
      %v676 = vpop.f32.mrb[0].mxu0
      %677 = vmatprep.mubr.f32.mxu0 0.0
      %678 = vmatmul.mubr.f32.gmra.mrb[0].mxu0 %v497
      %v679 = vpop.f32.mrb[0].mxu0
      %v680 = vadd.f32 %v532, %v679
      %v681 = vpop.f32.mrb[0].mxu0
      %682 = vmatprep.mubr.f32.mxu0 0.0
      %683 = vmatmul.mubr.f32.gmra.mrb[0].mxu0 %v498
      %v684 = vpop.f32.mrb[0].mxu0
      %v685 = vadd.f32 %v532, %v684
      %v686 = vpop.f32.mrb[0].mxu0
      %687 = vmatprep.mubr.f32.mxu0 0.0
      %688 = vmatmul.mubr.f32.gmra.mrb[0].mxu0 %v499
      %v689 = vpop.f32.mrb[0].mxu0
      %v690 = vadd.f32 %v532, %v689
      %v691 = vpop.f32.mrb[0].mxu0
      %692 = vmatprep.mubr.f32.mxu0 0.0
      %693 = vmatmul.mubr.f32.gmra.mrb[0].mxu0 %v500
      %v694 = vpop.f32.mrb[0].mxu0
      %v695 = vadd.f32 %v532, %v694
      %v696 = vpop.f32.mrb[0].mxu0
      %697 = vmatprep.mubr.f32.mxu0 0.0
      %698 = vmatmul.mubr.f32.gmra.mrb[0].mxu0 %v501
      %v699 = vpop.f32.mrb[0].mxu0
      %v700 = vadd.f32 %v532, %v699
      %v701 = vpop.f32.mrb[0].mxu0
      %702 = vmatprep.mubr.f32.mxu0 0.0
      %703 = vmatmul.mubr.f32.gmra.mrb[0].mxu0 %v502
      %v704 = vpop.f32.mrb[0].mxu0
      %v705 = vadd.f32 %v532, %v704
      %v706 = vpop.f32.mrb[0].mxu0
      %707 = vmatprep.mubr.f32.mxu0 0.0
      %708 = vmatmul.mubr.f32.gmra.mrb[0].mxu0 %v503
      %v709 = vpop.f32.mrb[0].mxu0
      %v710 = vadd.f32 %v532, %v709
      %v711 = vpop.f32.mrb[0].mxu0
      %712 = vmatprep.mubr.f32.mxu0 0.0
      %713 = vmatmul.mubr.f32.gmra.mrb[0].mxu0 %v504
      %v714 = vpop.f32.mrb[0].mxu0
      %v715 = vadd.f32 %v532, %v714
      %v716 = vpop.f32.mrb[0].mxu0
      %717 = vmatprep.mubr.f32.mxu0 0.0
      %718 = vmatmul.mubr.f32.gmra.mrb[0].mxu0 %v505
      %v719 = vpop.f32.mrb[0].mxu0
      %v720 = vadd.f32 %v532, %v719
      %v721 = vpop.f32.mrb[0].mxu0
      %722 = vmatprep.mubr.f32.mxu0 0.0
      %723 = vmatmul.mubr.f32.gmra.mrb[0].mxu0 %v506
      %v724 = vpop.f32.mrb[0].mxu0
      %v725 = vadd.f32 %v532, %v724
      %v726 = vpop.f32.mrb[0].mxu0
      %727 = vmatprep.mubr.f32.mxu0 0.0
      %728 = vmatmul.mubr.f32.gmra.mrb[0].mxu0 %v507
      %v729 = vpop.f32.mrb[0].mxu0
      %v730 = vadd.f32 %v532, %v729
      %v731 = vpop.f32.mrb[0].mxu0
      %732 = vmatprep.mubr.f32.mxu0 0.0
      %733 = vmatmul.mubr.f32.gmra.mrb[0].mxu0 %v508
      %v734 = vpop.f32.mrb[0].mxu0
      %v735 = vadd.f32 %v532, %v734
      %v736 = vpop.f32.mrb[0].mxu0
      %737 = vmatprep.mubr.f32.mxu0 0.0
      %738 = vmatmul.mubr.f32.gmra.mrb[0].mxu0 %v509
      %v739 = vpop.f32.mrb[0].mxu0
      %v740 = vadd.f32 %v532, %v739
      %v741 = vpop.f32.mrb[0].mxu0
      %742 = vmatprep.mubr.f32.mxu0 0.0
      %743 = vmatmul.mubr.f32.gmra.mrb[0].mxu0 %v510
      %v744 = vpop.f32.mrb[0].mxu0
      %v745 = vadd.f32 %v532, %v744
      %v746 = vpop.f32.mrb[0].mxu0
      %747 = vmatprep.mubr.f32.mxu0 0.0
      %748 = vmatmul.mubr.f32.gmra.mrb[0].mxu0 %v511
      %v749 = vpop.f32.mrb[0].mxu0
      %v750 = vadd.f32 %v532, %v749
      %v751 = vpop.f32.mrb[0].mxu0
      %752 = vmatprep.mubr.f32.mxu0 0.0
      %753 = vmatmul.mubr.f32.gmra.mrb[0].mxu0 %v512
      %v754 = vpop.f32.mrb[0].mxu0
      %v755 = vadd.f32 %v532, %v754
      %v756 = vpop.f32.mrb[0].mxu0
      %757 = vdwg.mxu0
      %v758 = vtanh.pop %v600
      %v759 = vtanh.pop %v605
      %v760 = vtanh.pop %v610
      %v761 = vtanh.pop %v615
      %v762 = vtanh.pop %v620
      %v763 = vtanh.pop %v625
      %v764 = vtanh.pop %v630
      %v765 = vtanh.pop %v635
      %v766 = vtanh.pop %v640
      %v767 = vtanh.pop %v645
      %v768 = vtanh.pop %v650
      %v769 = vtanh.pop %v655
      %v770 = vtanh.pop %v660
      %v771 = vtanh.pop %v665
      %v772 = vtanh.pop %v670
      %v773 = vtanh.pop %v675
      %v774 = vtanh.pop %v680
      %v775 = vtanh.pop %v685
      %v776 = vtanh.pop %v690
      %v777 = vtanh.pop %v695
      %v778 = vtanh.pop %v700
      %v779 = vtanh.pop %v705
      %v780 = vtanh.pop %v710
      %v781 = vtanh.pop %v715
      %v782 = vtanh.pop %v720
      %v783 = vtanh.pop %v725
      %v784 = vtanh.pop %v730
      %v785 = vtanh.pop %v735
      %v786 = vtanh.pop %v740
      %v787 = vtanh.pop %v745
      %v788 = vtanh.pop %v750
      %v789 = vtanh.pop %v755
      %v790 = vlaneseq
      %v791 = vshrl.u32 %v790, 7
      %v792 = vsub.s32 0, %v791
      %v793 = vrot.slane %v203, %v792
      %v794 = vmul.f32 %v758, %v793
      %v795 = vmul.f32 %v759, %v793
      %v796 = vmul.f32 %v760, %v793
      %v797 = vmul.f32 %v761, %v793
      %v798 = vmul.f32 %v762, %v793
      %v799 = vmul.f32 %v763, %v793
      %v800 = vmul.f32 %v764, %v793
      %v801 = vmul.f32 %v765, %v793
      %v802 = vmul.f32 %v766, %v793
      %v803 = vmul.f32 %v767, %v793
      %v804 = vmul.f32 %v768, %v793
      %v805 = vmul.f32 %v769, %v793
      %v806 = vmul.f32 %v770, %v793
      %v807 = vmul.f32 %v771, %v793
      %v808 = vmul.f32 %v772, %v793
      %v809 = vmul.f32 %v773, %v793
      %v810 = vmul.f32 %v774, %v793
      %v811 = vmul.f32 %v775, %v793
      %v812 = vmul.f32 %v776, %v793
      %v813 = vmul.f32 %v777, %v793
      %v814 = vmul.f32 %v778, %v793
      %v815 = vmul.f32 %v779, %v793
      %v816 = vmul.f32 %v780, %v793
      %v817 = vmul.f32 %v781, %v793
      %v818 = vmul.f32 %v782, %v793
      %v819 = vmul.f32 %v783, %v793
      %v820 = vmul.f32 %v784, %v793
      %v821 = vmul.f32 %v785, %v793
      %v822 = vmul.f32 %v786, %v793
      %v823 = vmul.f32 %v787, %v793
      %v824 = vmul.f32 %v788, %v793
      %v825 = vmul.f32 %v789, %v793
      %826 = vst [vmem:[%s199] sm:$0xff] %v794
      %827 = vst [vmem:[%s199 + $0x8] sm:$0xff] %v795
      %828 = vst [vmem:[%s199 + $0x10] sm:$0xff] %v796
      %829 = vst [vmem:[%s199 + $0x18] sm:$0xff] %v797
      %830 = vst [vmem:[%s199 + $0x20] sm:$0xff] %v798
      %831 = vst [vmem:[%s199 + $0x28] sm:$0xff] %v799
      %832 = vst [vmem:[%s199 + $0x30] sm:$0xff] %v800
      %833 = vst [vmem:[%s199 + $0x38] sm:$0xff] %v801
      %834 = vst [vmem:[%s199 + $0x40] sm:$0xff] %v802
      %835 = vst [vmem:[%s199 + $0x48] sm:$0xff] %v803
      %836 = vst [vmem:[%s199 + $0x50] sm:$0xff] %v804
      %837 = vst [vmem:[%s199 + $0x58] sm:$0xff] %v805
      %838 = vst [vmem:[%s199 + $0x60] sm:$0xff] %v806
      %839 = vst [vmem:[%s199 + $0x68] sm:$0xff] %v807
      %840 = vst [vmem:[%s199 + $0x70] sm:$0xff] %v808
      %841 = vst [vmem:[%s199 + $0x78] sm:$0xff] %v809
      %842 = vst [vmem:[%s199 + $0x80] sm:$0xff] %v810
      %843 = vst [vmem:[%s199 + $0x88] sm:$0xff] %v811
      %844 = vst [vmem:[%s199 + $0x90] sm:$0xff] %v812
      %845 = vst [vmem:[%s199 + $0x98] sm:$0xff] %v813
      %846 = vst [vmem:[%s199 + $0xa0] sm:$0xff] %v814
      %847 = vst [vmem:[%s199 + $0xa8] sm:$0xff] %v815
      %848 = vst [vmem:[%s199 + $0xb0] sm:$0xff] %v816
      %849 = vst [vmem:[%s199 + $0xb8] sm:$0xff] %v817
      %850 = vst [vmem:[%s199 + $0xc0] sm:$0xff] %v818
      %851 = vst [vmem:[%s199 + $0xc8] sm:$0xff] %v819
      %852 = vst [vmem:[%s199 + $0xd0] sm:$0xff] %v820
      %853 = vst [vmem:[%s199 + $0xd8] sm:$0xff] %v821
      %854 = vst [vmem:[%s199 + $0xe0] sm:$0xff] %v822
      %855 = vst [vmem:[%s199 + $0xe8] sm:$0xff] %v823
      %856 = vst [vmem:[%s199 + $0xf0] sm:$0xff] %v824
      %857 = vst [vmem:[%s199 + $0xf8] sm:$0xff] %v825
      %s858 = smul.u32 32, %s15
      %p859 = scmp.lt.s32.totalorder %s858, 63
      %s860 = scalar_select %p859, %s858, 63
      %s861 = smul.addr %s860, 8
      %s862 = scalar_lea.vmem %s4, %s861
      // Predicated region
      $region37: #{policy_forward.1} parent=35 // pred_check
        %p863 = pneg %p122
      $region38: #{policy_forward.1} parent=35 // pred_check_branch
        %865 = sbr.rel (%p863) target = $region40
      $region39: #{policy_forward.1} parent=35 // pred_region
        %s866 = smul.u32 32, %s15
      $region40: #{policy_forward.1} parent=35 // pred_fallthru
        _
    $region36: #{policy_forward.1} parent=5 // pred_fallthru
      _
    %p867 = scmp.le.s32.totalorder 2, %s10
    // Predicated region
    $region41: #{policy_forward.1} parent=5 // pred_check
      %p868 = pneg %p867
    $region42: #{policy_forward.1} parent=5 // pred_check_branch
      %870 = sbr.rel (%p868) target = $region44
    $region43: #{policy_forward.1} parent=5 // pred_region
      %s871 = ssub.s32 %s10, 2
      // Predicated region
      $region45: #{policy_forward.1} parent=43 // pred_check
        %p872 = pneg %p128
      $region46: #{policy_forward.1} parent=43 // pred_check_branch
        %874 = sbr.rel (%p872) target = $region48
      $region47: #{policy_forward.1} parent=43 // pred_region
        %s875 = smul.u32 32, %s16
        %p876 = scmp.lt.s32.totalorder %s875, 63
        %s877 = scalar_select %p876, %s875, 63
        %s878 = smul.addr %s877, 8
        %s879 = scalar_lea.vmem %s4, %s878
      $region48: #{policy_forward.1} parent=43 // pred_fallthru
        _
    $region44: #{policy_forward.1} parent=5 // pred_fallthru
      _
  $region6: #{policy_forward.1} parent=0 // loop_footer
    %s14 = sadd.s32 1, %s10
  $region7: #{policy_forward.1} parent=0 // loop_footer_branch
    %9 = sbr.rel target = $region3
  $region8: #{policy_forward.1} parent=0 // loop_exit
    _

</llo_original>
